<compile_context>
chip_gen: v6e
topology: v6e:2x2x1
jax: 0.10.0
libtpu: 0.0.40
codegen_flags: <defaults>
</compile_context>

<pallas_src>
import functools

import jax
import jax.numpy as jnp
import numpy as np
from jax import lax
from jax.experimental import pallas as pl
from jax.experimental.pallas import tpu as pltpu


# ----------------------------------------------------------------------------
# Pallas kernel: fused 2-layer LSTM autoencoder rollout + label head
# ----------------------------------------------------------------------------
def _lstm_ae_kernel(g0_ref, w0_ref, b0_ref, w1_ref, b1_ref,
                    decw_ref, decb_ref, outw_ref, outb_ref,
                    seq_ref, label_ref):
    seq_len, B, F = seq_ref.shape
    H = w0_ref.shape[0] // 2          # w0 is (2H, 4H)

    # Hoist weight loads and bias broadcasts out of the time loop
    # (JAX does not CSE broadcast_in_dim inside the loop).
    w0 = w0_ref[...]                                   # (2H, 4H) folded feedback | whh0
    w1 = w1_ref[...]                                   # (2H, 4H) wih1 | whh1
    decw = decw_ref[...]                               # (H, F)
    b0 = jnp.broadcast_to(b0_ref[...], (B, 4 * H))
    b1 = jnp.broadcast_to(b1_ref[...], (B, 4 * H))
    decb = jnp.broadcast_to(decb_ref[...], (B, F))

    def cell(gates, c_prev):
        # Full-vreg activations over all 4H (=128) lanes, slice afterwards.
        # PyTorch gate order: i, f, g, o.
        sig = jax.nn.sigmoid(gates)
        tnh = jnp.tanh(gates)
        i = sig[:, 0:H]
        f = sig[:, H:2 * H]
        o = sig[:, 3 * H:4 * H]
        g = tnh[:, 2 * H:3 * H]
        c_new = f * c_prev + i * g
        h_new = o * jnp.tanh(c_new)
        return h_new, c_new

    zeros_h = jnp.zeros((B, H), jnp.float32)

    # ---- t = 0: encoder already folded into g0 (precomputed); zero LSTM state ----
    h0, c0 = cell(g0_ref[...], zeros_h)
    gates1 = jnp.dot(jnp.concatenate([h0, zeros_h], axis=-1), w1,
                     preferred_element_type=jnp.float32) + b1
    h1, c1 = cell(gates1, zeros_h)
    dec = jnp.dot(h1, decw, preferred_element_type=jnp.float32) + decb
    seq_ref[0, :, :] = dec
    # TODO(synk): inter-layer dropout (p=0.2) is train-only stochastic; eval path has none.

    # ---- t = 1 .. seq_len-1: decoder->encoder feedback folded into w0 ----
    def step(t, carry):
        h0, c0, h1, c1 = carry
        gates0 = jnp.dot(jnp.concatenate([h1, h0], axis=-1), w0,
                         preferred_element_type=jnp.float32) + b0
        h0n, c0n = cell(gates0, c0)
        gates1 = jnp.dot(jnp.concatenate([h0n, h1], axis=-1), w1,
                         preferred_element_type=jnp.float32) + b1
        h1n, c1n = cell(gates1, c1)
        dec = jnp.dot(h1n, decw, preferred_element_type=jnp.float32) + decb
        seq_ref[t, :, :] = dec
        return (h0n, c0n, h1n, c1n)

    h0, c0, h1, c1 = lax.fori_loop(1, seq_len, step, (h0, c0, h1, c1))

    # Label head on h[-1] of the final step only (no dead per-step matmuls/stores).
    label_ref[...] = (jnp.dot(h1, outw_ref[...], preferred_element_type=jnp.float32)
                      + outb_ref[...])


# ----------------------------------------------------------------------------
# Wrapper
# ----------------------------------------------------------------------------
def preprocess_batch(data, minutes_per_segment=30):
    """(B, num_days, feat, 1440) -> (B, num_days*48, feat*30)."""
    B, D, feat, mins = data.shape
    assert mins == 24 * 60, f"expected 1440 minutes per day, got {mins}"
    spd = mins // minutes_per_segment
    x = data.reshape(B, D, feat, spd, minutes_per_segment)
    x = jnp.transpose(x, (0, 1, 3, 2, 4))
    x = x.reshape(B, D * spd, feat * minutes_per_segment)
    return jnp.nan_to_num(x, nan=0.0)


@functools.partial(jax.jit, static_argnames=("prediction_horizon",))
def autoencoder_lstm_forward(data, params, prediction_horizon=1):
    x = preprocess_batch(data)
    input_segments = x[:, :-prediction_horizon, :]
    target_segments = x[:, prediction_horizon:, :]

    B, seq_len, F = input_segments.shape
    H = params["whh0"].shape[0]
    x0 = input_segments[:, 0, :]          # eval path consumes only segment 0

    # --- one-time weight folding (plain JAX; fused into the surrounding jit) ---
    enc_wih0 = params["encw"] @ params["wih0"]                       # (F, 4H)
    encb_wih0 = params["encb"] @ params["wih0"]                      # (1, 4H)
    g0 = x0 @ enc_wih0 + encb_wih0 + params["b0"]                    # (B, 4H), t=0 gates (h0=0)
    w0_comb = jnp.concatenate(                                       # (2H, 4H)
        [params["decw"] @ enc_wih0, params["whh0"]], axis=0)
    b0_fold = params["decb"] @ enc_wih0 + encb_wih0 + params["b0"]   # (1, 4H)
    w1_comb = jnp.concatenate(                                       # (2H, 4H)
        [params["wih1"], params["whh1"]], axis=0)

    inputs = (g0, w0_comb, b0_fold, w1_comb, params["b1"],
              params["decw"], params["decb"], params["outw"], params["outb"])

    def full2d(a):
        return pl.BlockSpec(a.shape, lambda t: (0, 0))

    grid_spec = pltpu.PrefetchScalarGridSpec(
        num_scalar_prefetch=0,
        grid=(1,),                      # single invocation; time loop is inside the body
        in_specs=[full2d(a) for a in inputs],
        out_specs=[
            pl.BlockSpec((seq_len, B, F), lambda t: (0, 0, 0)),   # whole sequence, one DMA
            pl.BlockSpec((B, 1), lambda t: (0, 0)),               # label head
        ],
    )

    seq_tbf, label = pl.pallas_call(
        _lstm_ae_kernel,
        out_shape=(jax.ShapeDtypeStruct((seq_len, B, F), jnp.float32),
                   jax.ShapeDtypeStruct((B, 1), jnp.float32)),
        grid_spec=grid_spec,
        compiler_params=pltpu.CompilerParams(dimension_semantics=("arbitrary",)),
    )(*inputs)

    return {
        "sequence_output": jnp.transpose(seq_tbf, (1, 0, 2)),   # (B, seq_len, F)
        "target_segments": target_segments,
        "label_predictions": {"default": label[:, 0]},          # (B,)
    }


# ----------------------------------------------------------------------------
# Deterministic synthetic parameters (PyTorch-style uniform init shapes)
# ----------------------------------------------------------------------------
def init_params(key, num_features=4, hidden_size=32, encoding_dim=64):
    F = num_features * 30
    H = hidden_size
    E = encoding_dim
    ks = jax.random.split(key, 14)

    def unif(k, shape, fan_in):
        bound = 1.0 / np.sqrt(fan_in)
        return jax.random.uniform(k, shape, jnp.float32, -bound, bound)

    return dict(
        encw=unif(ks[0], (F, E), F),      encb=unif(ks[1], (1, E), F),
        wih0=unif(ks[2], (E, 4 * H), H),  whh0=unif(ks[3], (H, 4 * H), H),
        b0=unif(ks[4], (1, 4 * H), H) + unif(ks[5], (1, 4 * H), H),   # b_ih + b_hh
        wih1=unif(ks[6], (H, 4 * H), H),  whh1=unif(ks[7], (H, 4 * H), H),
        b1=unif(ks[8], (1, 4 * H), H) + unif(ks[9], (1, 4 * H), H),
        decw=unif(ks[10], (H, F), H),     decb=unif(ks[11], (1, F), H),
        outw=unif(ks[12], (H, 1), H),     outb=unif(ks[13], (1, 1), H),
    )


# ----------------------------------------------------------------------------
# Pure-JAX reference (unfused; same eval-path semantics as the PyTorch forward)
# ----------------------------------------------------------------------------
def reference_forward(data, params, prediction_horizon=1):
    x = preprocess_batch(data)
    input_segments = x[:, :-prediction_horizon, :]
    seq_len = input_segments.shape[1]
    H = params["whh0"].shape[0]
    B = x.shape[0]

    def cell(xv, h, c, wih, whh, b):
        g = xv @ wih + h @ whh + b
        i = jax.nn.sigmoid(g[:, 0:H]); f = jax.nn.sigmoid(g[:, H:2 * H])
        gg = jnp.tanh(g[:, 2 * H:3 * H]); o = jax.nn.sigmoid(g[:, 3 * H:4 * H])
        c = f * c + i * gg
        h = o * jnp.tanh(c)
        return h, c

    h0 = jnp.zeros((B, H)); c0 = jnp.zeros((B, H))
    h1 = jnp.zeros((B, H)); c1 = jnp.zeros((B, H))
    cur = input_segments[:, 0, :]
    outs = []
    for _ in range(seq_len):
        enc = cur @ params["encw"] + params["encb"]
        h0, c0 = cell(enc, h0, c0, params["wih0"], params["whh0"], params["b0"])
        h1, c1 = cell(h0, h1, c1, params["wih1"], params["whh1"], params["b1"])
        dec = h1 @ params["decw"] + params["decb"]
        outs.append(dec)
        cur = dec
    seq = jnp.stack(outs, axis=1)
    label = (h1 @ params["outw"] + params["outb"])[:, 0]
    return seq, label


if __name__ == "__main__":
    key = jax.random.PRNGKey(0)
    k_data, k_params = jax.random.split(key)

    # Small shapes consistent with the module: batch=2, 1 day, 4 features/min,
    # 1440 minutes -> 48 segments of 120 features each; hidden=32, encoding=64.
    data = jax.random.normal(k_data, (2, 1, 4, 1440), dtype=jnp.float32)
    params = init_params(k_params, num_features=4, hidden_size=32, encoding_dim=64)

    out = autoencoder_lstm_forward(data, params, prediction_horizon=1)
    jax.block_until_ready(out)

    assert out["sequence_output"].shape == (2, 47, 120)
    assert out["target_segments"].shape == (2, 47, 120)
    assert out["label_predictions"]["default"].shape == (2,)

    ref_seq, ref_label = reference_forward(data, params)
    np.testing.assert_allclose(np.asarray(out["sequence_output"]), np.asarray(ref_seq),
                               rtol=5e-2, atol=5e-2)
    np.testing.assert_allclose(np.asarray(out["label_predictions"]["default"]),
                               np.asarray(ref_label), rtol=5e-2, atol=5e-2)

    print("KERNEL_OK")
</pallas_src>

<mosaic_0001>
module attributes {stable_mosaic.version = 11 : i64} {
  func.func @_lstm_ae_kernel(%arg0: i32, %arg1: memref<2x128xf32, #tpu.memory_space<vmem>>, %arg2: memref<64x128xf32, #tpu.memory_space<vmem>>, %arg3: memref<1x128xf32, #tpu.memory_space<vmem>>, %arg4: memref<64x128xf32, #tpu.memory_space<vmem>>, %arg5: memref<1x128xf32, #tpu.memory_space<vmem>>, %arg6: memref<32x120xf32, #tpu.memory_space<vmem>>, %arg7: memref<1x120xf32, #tpu.memory_space<vmem>>, %arg8: memref<32x1xf32, #tpu.memory_space<vmem>>, %arg9: memref<1x1xf32, #tpu.memory_space<vmem>>, %arg10: memref<47x2x120xf32, #tpu.memory_space<vmem>>, %arg11: memref<2x1xf32, #tpu.memory_space<vmem>>) attributes {dimension_semantics = [#tpu.dimension_semantics<arbitrary>], iteration_bounds = array<i64: 1>, scalar_prefetch = 0 : i64, scratch_operands = 0 : i64, tpu.core_type = #tpu.core_type<tc>, window_params = [{pipeline_mode = #tpu.pipeline_mode<synchronous>, transform_indices = @transform_0, window_bounds = array<i64: 2, 128>}, {pipeline_mode = #tpu.pipeline_mode<synchronous>, transform_indices = @transform_1, window_bounds = array<i64: 64, 128>}, {pipeline_mode = #tpu.pipeline_mode<synchronous>, transform_indices = @transform_2, window_bounds = array<i64: 1, 128>}, {pipeline_mode = #tpu.pipeline_mode<synchronous>, transform_indices = @transform_3, window_bounds = array<i64: 64, 128>}, {pipeline_mode = #tpu.pipeline_mode<synchronous>, transform_indices = @transform_4, window_bounds = array<i64: 1, 128>}, {pipeline_mode = #tpu.pipeline_mode<synchronous>, transform_indices = @transform_5, window_bounds = array<i64: 32, 120>}, {pipeline_mode = #tpu.pipeline_mode<synchronous>, transform_indices = @transform_6, window_bounds = array<i64: 1, 120>}, {pipeline_mode = #tpu.pipeline_mode<synchronous>, transform_indices = @transform_7, window_bounds = array<i64: 32, 1>}, {pipeline_mode = #tpu.pipeline_mode<synchronous>, transform_indices = @transform_8, window_bounds = array<i64: 1, 1>}, {pipeline_mode = #tpu.pipeline_mode<synchronous>, transform_indices = @transform_9, window_bounds = array<i64: 47, 2, 120>}, {pipeline_mode = #tpu.pipeline_mode<synchronous>, transform_indices = @transform_10, window_bounds = array<i64: 2, 1>}]} {
    %c0 = arith.constant 0 : index
    %c0_0 = arith.constant 0 : index
    %0 = vector.load %arg2[%c0, %c0_0] : memref<64x128xf32, #tpu.memory_space<vmem>>, vector<64x128xf32>
    %c0_1 = arith.constant 0 : index
    %c0_2 = arith.constant 0 : index
    %1 = vector.load %arg4[%c0_1, %c0_2] : memref<64x128xf32, #tpu.memory_space<vmem>>, vector<64x128xf32>
    %c0_3 = arith.constant 0 : index
    %c0_4 = arith.constant 0 : index
    %2 = vector.load %arg6[%c0_3, %c0_4] : memref<32x120xf32, #tpu.memory_space<vmem>>, vector<32x120xf32>
    %c0_5 = arith.constant 0 : index
    %c0_6 = arith.constant 0 : index
    %3 = vector.load %arg3[%c0_5, %c0_6] : memref<1x128xf32, #tpu.memory_space<vmem>>, vector<1x128xf32>
    %4 = vector.shape_cast %3 : vector<1x128xf32> to vector<1x128xf32>
    %5 = vector.broadcast %4 : vector<1x128xf32> to vector<2x128xf32>
    %c0_7 = arith.constant 0 : index
    %c0_8 = arith.constant 0 : index
    %6 = vector.load %arg5[%c0_7, %c0_8] : memref<1x128xf32, #tpu.memory_space<vmem>>, vector<1x128xf32>
    %7 = vector.shape_cast %6 : vector<1x128xf32> to vector<1x128xf32>
    %8 = vector.broadcast %7 : vector<1x128xf32> to vector<2x128xf32>
    %c0_9 = arith.constant 0 : index
    %c0_10 = arith.constant 0 : index
    %9 = vector.load %arg7[%c0_9, %c0_10] : memref<1x120xf32, #tpu.memory_space<vmem>>, vector<1x120xf32>
    %10 = vector.shape_cast %9 : vector<1x120xf32> to vector<1x120xf32>
    %11 = vector.broadcast %10 : vector<1x120xf32> to vector<2x120xf32>
    %cst = arith.constant 0.000000e+00 : f32
    %12 = vector.broadcast %cst : f32 to vector<2x32xf32>
    %c0_11 = arith.constant 0 : index
    %c0_12 = arith.constant 0 : index
    %13 = vector.load %arg1[%c0_11, %c0_12] : memref<2x128xf32, #tpu.memory_space<vmem>>, vector<2x128xf32>
    %14 = arith.negf %13 : vector<2x128xf32>
    %15 = math.exp %14 : vector<2x128xf32>
    %cst_13 = arith.constant 1.000000e+00 : f32
    %16 = vector.broadcast %cst_13 : f32 to vector<2x128xf32>
    %17 = arith.addf %16, %15 : vector<2x128xf32>
    %18 = arith.divf %16, %17 : vector<2x128xf32>
    %19 = math.tanh %13 : vector<2x128xf32>
    %20 = vector.extract_strided_slice %18 {offsets = [0, 0], sizes = [2, 32], strides = [1, 1]} : vector<2x128xf32> to vector<2x32xf32>
    %21 = vector.extract_strided_slice %18 {offsets = [0, 32], sizes = [2, 32], strides = [1, 1]} : vector<2x128xf32> to vector<2x32xf32>
    %22 = vector.extract_strided_slice %18 {offsets = [0, 96], sizes = [2, 32], strides = [1, 1]} : vector<2x128xf32> to vector<2x32xf32>
    %23 = vector.extract_strided_slice %19 {offsets = [0, 64], sizes = [2, 32], strides = [1, 1]} : vector<2x128xf32> to vector<2x32xf32>
    %24 = arith.mulf %21, %12 : vector<2x32xf32>
    %25 = arith.mulf %20, %23 : vector<2x32xf32>
    %26 = arith.addf %24, %25 : vector<2x32xf32>
    %27 = math.tanh %26 : vector<2x32xf32>
    %28 = arith.mulf %22, %27 : vector<2x32xf32>
    %29 = tpu.concatenate %28, %12 in 1 : vector<2x32xf32>, vector<2x32xf32> -> vector<2x64xf32>
    %cst_14 = arith.constant dense<0.000000e+00> : vector<2x128xf32>
    %30 = tpu.matmul %29, %1, %cst_14 {dimension_numbers = #tpu.dot_dimension_numbers<[1], [0], [0], [1], [0, 0, 1, 1], [], []>} : vector<2x64xf32>, vector<64x128xf32>, vector<2x128xf32> -> vector<2x128xf32>
    %31 = arith.addf %30, %8 : vector<2x128xf32>
    %32 = arith.negf %31 : vector<2x128xf32>
    %33 = math.exp %32 : vector<2x128xf32>
    %cst_15 = arith.constant 1.000000e+00 : f32
    %34 = vector.broadcast %cst_15 : f32 to vector<2x128xf32>
    %35 = arith.addf %34, %33 : vector<2x128xf32>
    %36 = arith.divf %34, %35 : vector<2x128xf32>
    %37 = math.tanh %31 : vector<2x128xf32>
    %38 = vector.extract_strided_slice %36 {offsets = [0, 0], sizes = [2, 32], strides = [1, 1]} : vector<2x128xf32> to vector<2x32xf32>
    %39 = vector.extract_strided_slice %36 {offsets = [0, 32], sizes = [2, 32], strides = [1, 1]} : vector<2x128xf32> to vector<2x32xf32>
    %40 = vector.extract_strided_slice %36 {offsets = [0, 96], sizes = [2, 32], strides = [1, 1]} : vector<2x128xf32> to vector<2x32xf32>
    %41 = vector.extract_strided_slice %37 {offsets = [0, 64], sizes = [2, 32], strides = [1, 1]} : vector<2x128xf32> to vector<2x32xf32>
    %42 = arith.mulf %39, %12 : vector<2x32xf32>
    %43 = arith.mulf %38, %41 : vector<2x32xf32>
    %44 = arith.addf %42, %43 : vector<2x32xf32>
    %45 = math.tanh %44 : vector<2x32xf32>
    %46 = arith.mulf %40, %45 : vector<2x32xf32>
    %cst_16 = arith.constant dense<0.000000e+00> : vector<2x120xf32>
    %47 = tpu.matmul %46, %2, %cst_16 {dimension_numbers = #tpu.dot_dimension_numbers<[1], [0], [0], [1], [0, 0, 1, 1], [], []>} : vector<2x32xf32>, vector<32x120xf32>, vector<2x120xf32> -> vector<2x120xf32>
    %48 = arith.addf %47, %11 : vector<2x120xf32>
    %c0_17 = arith.constant 0 : index
    %c0_18 = arith.constant 0 : index
    %c0_19 = arith.constant 0 : index
    %49 = vector.load %arg10[%c0_17, %c0_18, %c0_19] : memref<47x2x120xf32, #tpu.memory_space<vmem>>, vector<1x2x120xf32>
    %50 = vector.shape_cast %49 : vector<1x2x120xf32> to vector<2x120xf32>
    %51 = vector.shape_cast %48 : vector<2x120xf32> to vector<1x2x120xf32>
    tpu.vector_store %arg10[%c0_17, %c0_18, %c0_19], %51 {strides = array<i32>} : memref<47x2x120xf32, #tpu.memory_space<vmem>>, vector<1x2x120xf32>,
    %c1_i32 = arith.constant 1 : i32
    %c46_i32 = arith.constant 46 : i32
    %52 = arith.addi %c1_i32, %c46_i32 : i32
    %c1_i32_20 = arith.constant 1 : i32
    %53:4 = scf.for %arg12 = %c1_i32 to %52 step %c1_i32_20 iter_args(%arg13 = %28, %arg14 = %26, %arg15 = %46, %arg16 = %44) -> (vector<2x32xf32>, vector<2x32xf32>, vector<2x32xf32>, vector<2x32xf32>)  : i32 {
      %60 = tpu.concatenate %arg15, %arg13 in 1 : vector<2x32xf32>, vector<2x32xf32> -> vector<2x64xf32>
      %cst_29 = arith.constant dense<0.000000e+00> : vector<2x128xf32>
      %61 = tpu.matmul %60, %0, %cst_29 {dimension_numbers = #tpu.dot_dimension_numbers<[1], [0], [0], [1], [0, 0, 1, 1], [], []>} : vector<2x64xf32>, vector<64x128xf32>, vector<2x128xf32> -> vector<2x128xf32>
      %62 = arith.addf %61, %5 : vector<2x128xf32>
      %63 = arith.negf %62 : vector<2x128xf32>
      %64 = math.exp %63 : vector<2x128xf32>
      %cst_30 = arith.constant 1.000000e+00 : f32
      %65 = vector.broadcast %cst_30 : f32 to vector<2x128xf32>
      %66 = arith.addf %65, %64 : vector<2x128xf32>
      %67 = arith.divf %65, %66 : vector<2x128xf32>
      %68 = math.tanh %62 : vector<2x128xf32>
      %69 = vector.extract_strided_slice %67 {offsets = [0, 0], sizes = [2, 32], strides = [1, 1]} : vector<2x128xf32> to vector<2x32xf32>
      %70 = vector.extract_strided_slice %67 {offsets = [0, 32], sizes = [2, 32], strides = [1, 1]} : vector<2x128xf32> to vector<2x32xf32>
      %71 = vector.extract_strided_slice %67 {offsets = [0, 96], sizes = [2, 32], strides = [1, 1]} : vector<2x128xf32> to vector<2x32xf32>
      %72 = vector.extract_strided_slice %68 {offsets = [0, 64], sizes = [2, 32], strides = [1, 1]} : vector<2x128xf32> to vector<2x32xf32>
      %73 = arith.mulf %70, %arg14 : vector<2x32xf32>
      %74 = arith.mulf %69, %72 : vector<2x32xf32>
      %75 = arith.addf %73, %74 : vector<2x32xf32>
      %76 = math.tanh %75 : vector<2x32xf32>
      %77 = arith.mulf %71, %76 : vector<2x32xf32>
      %78 = tpu.concatenate %77, %arg15 in 1 : vector<2x32xf32>, vector<2x32xf32> -> vector<2x64xf32>
      %cst_31 = arith.constant dense<0.000000e+00> : vector<2x128xf32>
      %79 = tpu.matmul %78, %1, %cst_31 {dimension_numbers = #tpu.dot_dimension_numbers<[1], [0], [0], [1], [0, 0, 1, 1], [], []>} : vector<2x64xf32>, vector<64x128xf32>, vector<2x128xf32> -> vector<2x128xf32>
      %80 = arith.addf %79, %8 : vector<2x128xf32>
      %81 = arith.negf %80 : vector<2x128xf32>
      %82 = math.exp %81 : vector<2x128xf32>
      %cst_32 = arith.constant 1.000000e+00 : f32
      %83 = vector.broadcast %cst_32 : f32 to vector<2x128xf32>
      %84 = arith.addf %83, %82 : vector<2x128xf32>
      %85 = arith.divf %83, %84 : vector<2x128xf32>
      %86 = math.tanh %80 : vector<2x128xf32>
      %87 = vector.extract_strided_slice %85 {offsets = [0, 0], sizes = [2, 32], strides = [1, 1]} : vector<2x128xf32> to vector<2x32xf32>
      %88 = vector.extract_strided_slice %85 {offsets = [0, 32], sizes = [2, 32], strides = [1, 1]} : vector<2x128xf32> to vector<2x32xf32>
      %89 = vector.extract_strided_slice %85 {offsets = [0, 96], sizes = [2, 32], strides = [1, 1]} : vector<2x128xf32> to vector<2x32xf32>
      %90 = vector.extract_strided_slice %86 {offsets = [0, 64], sizes = [2, 32], strides = [1, 1]} : vector<2x128xf32> to vector<2x32xf32>
      %91 = arith.mulf %88, %arg16 : vector<2x32xf32>
      %92 = arith.mulf %87, %90 : vector<2x32xf32>
      %93 = arith.addf %91, %92 : vector<2x32xf32>
      %94 = math.tanh %93 : vector<2x32xf32>
      %95 = arith.mulf %89, %94 : vector<2x32xf32>
      %cst_33 = arith.constant dense<0.000000e+00> : vector<2x120xf32>
      %96 = tpu.matmul %95, %2, %cst_33 {dimension_numbers = #tpu.dot_dimension_numbers<[1], [0], [0], [1], [0, 0, 1, 1], [], []>} : vector<2x32xf32>, vector<32x120xf32>, vector<2x120xf32> -> vector<2x120xf32>
      %97 = arith.addf %96, %11 : vector<2x120xf32>
      %98 = arith.index_cast %arg12 : i32 to index
      %c0_34 = arith.constant 0 : index
      %c0_35 = arith.constant 0 : index
      %99 = vector.load %arg10[%98, %c0_34, %c0_35] : memref<47x2x120xf32, #tpu.memory_space<vmem>>, vector<1x2x120xf32>
      %100 = vector.shape_cast %99 : vector<1x2x120xf32> to vector<2x120xf32>
      %101 = vector.shape_cast %97 : vector<2x120xf32> to vector<1x2x120xf32>
      tpu.vector_store %arg10[%98, %c0_34, %c0_35], %101 {strides = array<i32>} : memref<47x2x120xf32, #tpu.memory_space<vmem>>, vector<1x2x120xf32>,
      scf.yield %77, %75, %95, %93 : vector<2x32xf32>, vector<2x32xf32>, vector<2x32xf32>, vector<2x32xf32>
    }
    %c46_i32_21 = arith.constant 46 : i32
    %c0_22 = arith.constant 0 : index
    %c0_23 = arith.constant 0 : index
    %54 = vector.load %arg8[%c0_22, %c0_23] : memref<32x1xf32, #tpu.memory_space<vmem>>, vector<32x1xf32>
    %cst_24 = arith.constant dense<0.000000e+00> : vector<2x1xf32>
    %55 = tpu.matmul %53#2, %54, %cst_24 {dimension_numbers = #tpu.dot_dimension_numbers<[1], [0], [0], [1], [0, 0, 1, 1], [], []>} : vector<2x32xf32>, vector<32x1xf32>, vector<2x1xf32> -> vector<2x1xf32>
    %c0_25 = arith.constant 0 : index
    %c0_26 = arith.constant 0 : index
    %56 = vector.load %arg9[%c0_25, %c0_26] : memref<1x1xf32, #tpu.memory_space<vmem>>, vector<1x1xf32>
    %57 = vector.broadcast %56 : vector<1x1xf32> to vector<2x1xf32>
    %58 = arith.addf %55, %57 : vector<2x1xf32>
    %c0_27 = arith.constant 0 : index
    %c0_28 = arith.constant 0 : index
    %59 = vector.load %arg11[%c0_27, %c0_28] : memref<2x1xf32, #tpu.memory_space<vmem>>, vector<2x1xf32>
    tpu.vector_store %arg11[%c0_27, %c0_28], %58 {strides = array<i32>} : memref<2x1xf32, #tpu.memory_space<vmem>>, vector<2x1xf32>,
    return
  }
  func.func @transform_0(%arg0: i32) -> (i32, i32) {
    %c0_i32 = arith.constant 0 : i32
    %c0_i32_0 = arith.constant 0 : i32
    %c0_i32_1 = arith.constant 0 : i32
    return %c0_i32, %c0_i32_0 : i32, i32
  }
  func.func @transform_1(%arg0: i32) -> (i32, i32) {
    %c0_i32 = arith.constant 0 : i32
    %c0_i32_0 = arith.constant 0 : i32
    %c0_i32_1 = arith.constant 0 : i32
    return %c0_i32, %c0_i32_0 : i32, i32
  }
  func.func @transform_2(%arg0: i32) -> (i32, i32) {
    %c0_i32 = arith.constant 0 : i32
    %c0_i32_0 = arith.constant 0 : i32
    %c0_i32_1 = arith.constant 0 : i32
    return %c0_i32, %c0_i32_0 : i32, i32
  }
  func.func @transform_3(%arg0: i32) -> (i32, i32) {
    %c0_i32 = arith.constant 0 : i32
    %c0_i32_0 = arith.constant 0 : i32
    %c0_i32_1 = arith.constant 0 : i32
    return %c0_i32, %c0_i32_0 : i32, i32
  }
  func.func @transform_4(%arg0: i32) -> (i32, i32) {
    %c0_i32 = arith.constant 0 : i32
    %c0_i32_0 = arith.constant 0 : i32
    %c0_i32_1 = arith.constant 0 : i32
    return %c0_i32, %c0_i32_0 : i32, i32
  }
  func.func @transform_5(%arg0: i32) -> (i32, i32) {
    %c0_i32 = arith.constant 0 : i32
    %c0_i32_0 = arith.constant 0 : i32
    %c0_i32_1 = arith.constant 0 : i32
    return %c0_i32, %c0_i32_0 : i32, i32
  }
  func.func @transform_6(%arg0: i32) -> (i32, i32) {
    %c0_i32 = arith.constant 0 : i32
    %c0_i32_0 = arith.constant 0 : i32
    %c0_i32_1 = arith.constant 0 : i32
    return %c0_i32, %c0_i32_0 : i32, i32
  }
  func.func @transform_7(%arg0: i32) -> (i32, i32) {
    %c0_i32 = arith.constant 0 : i32
    %c0_i32_0 = arith.constant 0 : i32
    %c0_i32_1 = arith.constant 0 : i32
    return %c0_i32, %c0_i32_0 : i32, i32
  }
  func.func @transform_8(%arg0: i32) -> (i32, i32) {
    %c0_i32 = arith.constant 0 : i32
    %c0_i32_0 = arith.constant 0 : i32
    %c0_i32_1 = arith.constant 0 : i32
    return %c0_i32, %c0_i32_0 : i32, i32
  }
  func.func @transform_9(%arg0: i32) -> (i32, i32, i32) {
    %c0_i32 = arith.constant 0 : i32
    %c0_i32_0 = arith.constant 0 : i32
    %c0_i32_1 = arith.constant 0 : i32
    %c0_i32_2 = arith.constant 0 : i32
    return %c0_i32, %c0_i32_0, %c0_i32_1 : i32, i32, i32
  }
  func.func @transform_10(%arg0: i32) -> (i32, i32) {
    %c0_i32 = arith.constant 0 : i32
    %c0_i32_0 = arith.constant 0 : i32
    %c0_i32_1 = arith.constant 0 : i32
    return %c0_i32, %c0_i32_0 : i32, i32
  }
}

</mosaic_0001>

<llo_original>
// kernel: autoencoder_lstm_forward.1
$region0: #{autoencoder_lstm_forward.1}
  #allocation0 [shape = 'u32[]', space=smem, size = 0x4, offset = 0x4, fixed_abs, tag = 'smem constant byte address 0x4 - core index']
  #allocation1 [shape = 'u32[144,128]{1,0:T(1,128)}', space=vmem, size = 0x12000, scoped, tag = 'internal scratch']
  #allocation2 [shape = 'f32[1,1]{1,0:T(1,128)S(1)}', space=vmem, size = 0x200, scoped, tag = 'scoped memory for autoencoder_lstm_forward.1']
  %s0 = inlined_call_operand.vmem [shape: f32[2,128], index: 0, kind: input, shape index: {}]
  %s1 = inlined_call_operand.vmem [shape: f32[64,128], index: 1, kind: input, shape index: {}]
  %s2 = inlined_call_operand.vmem [shape: f32[1,128], index: 2, kind: input, shape index: {}]
  %s3 = inlined_call_operand.vmem [shape: f32[64,128], index: 3, kind: input, shape index: {}]
  %s4 = inlined_call_operand.vmem [shape: f32[1,128], index: 4, kind: input, shape index: {}]
  %s5 = inlined_call_operand.vmem [shape: f32[32,120], index: 5, kind: input, shape index: {}]
  %s6 = inlined_call_operand.vmem [shape: f32[1,120], index: 6, kind: input, shape index: {}]
  %s7 = inlined_call_operand.vmem [shape: f32[32,1], index: 7, kind: input, shape index: {}]
  %s8 = inlined_call_operand.<no memory space> [shape: f32[1,1], index: 8, kind: input, shape index: {}]
  %s9 = inlined_call_operand.hbm [shape: f32[47,2,120], index: 9, kind: output, shape index: {0}]
  %s10 = inlined_call_operand.vmem [shape: f32[2,1], index: 10, kind: output, shape index: {1}]
  %11 = xla_tuple %s9, %s10
  %s12 = sld [smem:[#allocation0]]
  $region61: #{autoencoder_lstm_forward.1} parent=0
    _
  %s14 = ssub.s32 1, %s12
  %s15 = scalar_select 0, %s14, %s12
  %v16 = vstv %s8
  %17 = vst [vmem:[#allocation2] sm:$0x1] %v16
  $region1: #{autoencoder_lstm_forward.1} parent=0
    #allocation3 [shape = 'u8[48128]{0}', space=vmem, size = 0xbc00, scoped, tag = 'output window, operand 0, single buffered']
    #allocation4 [shape = 's32[1]{0}', space=sflag, size = 0x4, scoped, tag = 'scoped memory for autoencoder_lstm_forward.1']
    %18 = vsyncpa [#allocation4], 0
    // Predicated region
    $region2: #{autoencoder_lstm_forward.1} parent=1 // pred_check
      _
    $region3: #{autoencoder_lstm_forward.1} parent=1 // pred_check_branch
      %20 = sbr.rel (0) target = $region5
    $region4: #{autoencoder_lstm_forward.1} parent=1 // pred_region
      _
    $region5: #{autoencoder_lstm_forward.1} parent=1 // pred_fallthru
      _
    // Predicated region
    $region6: #{autoencoder_lstm_forward.1} parent=1 // pred_check
      _
    $region7: #{autoencoder_lstm_forward.1} parent=1 // pred_check_branch
      %22 = sbr.rel (0) target = $region9
    $region8: #{autoencoder_lstm_forward.1} parent=1 // pred_region
      _
    $region9: #{autoencoder_lstm_forward.1} parent=1 // pred_fallthru
      _
    // Predicated region
    $region10: #{autoencoder_lstm_forward.1} parent=1 // pred_check
      _
    $region11: #{autoencoder_lstm_forward.1} parent=1 // pred_check_branch
      %24 = sbr.rel (0) target = $region13
    $region12: #{autoencoder_lstm_forward.1} parent=1 // pred_region
      _
    $region13: #{autoencoder_lstm_forward.1} parent=1 // pred_fallthru
      _
    // Predicated region
    $region14: #{autoencoder_lstm_forward.1} parent=1 // pred_check
      _
    $region15: #{autoencoder_lstm_forward.1} parent=1 // pred_check_branch
      %26 = sbr.rel (0) target = $region17
    $region16: #{autoencoder_lstm_forward.1} parent=1 // pred_region
      _
    $region17: #{autoencoder_lstm_forward.1} parent=1 // pred_fallthru
      _
    // Predicated region
    $region18: #{autoencoder_lstm_forward.1} parent=1 // pred_check
      _
    $region19: #{autoencoder_lstm_forward.1} parent=1 // pred_check_branch
      %28 = sbr.rel (0) target = $region21
    $region20: #{autoencoder_lstm_forward.1} parent=1 // pred_region
      _
    $region21: #{autoencoder_lstm_forward.1} parent=1 // pred_fallthru
      _
    // Predicated region
    $region22: #{autoencoder_lstm_forward.1} parent=1 // pred_check
      _
    $region23: #{autoencoder_lstm_forward.1} parent=1 // pred_check_branch
      %30 = sbr.rel (0) target = $region25
    $region24: #{autoencoder_lstm_forward.1} parent=1 // pred_region
      _
    $region25: #{autoencoder_lstm_forward.1} parent=1 // pred_fallthru
      _
    // Predicated region
    $region26: #{autoencoder_lstm_forward.1} parent=1 // pred_check
      _
    $region27: #{autoencoder_lstm_forward.1} parent=1 // pred_check_branch
      %32 = sbr.rel (0) target = $region29
    $region28: #{autoencoder_lstm_forward.1} parent=1 // pred_region
      _
    $region29: #{autoencoder_lstm_forward.1} parent=1 // pred_fallthru
      _
    // Predicated region
    $region30: #{autoencoder_lstm_forward.1} parent=1 // pred_check
      _
    $region31: #{autoencoder_lstm_forward.1} parent=1 // pred_check_branch
      %34 = sbr.rel (0) target = $region33
    $region32: #{autoencoder_lstm_forward.1} parent=1 // pred_region
      _
    $region33: #{autoencoder_lstm_forward.1} parent=1 // pred_fallthru
      _
    // Predicated region
    $region34: #{autoencoder_lstm_forward.1} parent=1 // pred_check
      _
    $region35: #{autoencoder_lstm_forward.1} parent=1 // pred_check_branch
      %36 = sbr.rel (0) target = $region37
    $region36: #{autoencoder_lstm_forward.1} parent=1 // pred_region
      _
    $region37: #{autoencoder_lstm_forward.1} parent=1 // pred_fallthru
      _
    %v37 = vld [vmem:[%s1] sm:$0xff]
    %v38 = vld [vmem:[%s1 + $0x8] sm:$0xff]
    %v39 = vld [vmem:[%s1 + $0x10] sm:$0xff]
    %v40 = vld [vmem:[%s1 + $0x18] sm:$0xff]
    %v41 = vld [vmem:[%s1 + $0x20] sm:$0xff]
    %v42 = vld [vmem:[%s1 + $0x28] sm:$0xff]
    %v43 = vld [vmem:[%s1 + $0x30] sm:$0xff]
    %v44 = vld [vmem:[%s1 + $0x38] sm:$0xff]
    %v45 = vld [vmem:[%s3] sm:$0xff]
    %v46 = vld [vmem:[%s3 + $0x8] sm:$0xff]
    %v47 = vld [vmem:[%s3 + $0x10] sm:$0xff]
    %v48 = vld [vmem:[%s3 + $0x18] sm:$0xff]
    %v49 = vld [vmem:[%s3 + $0x20] sm:$0xff]
    %v50 = vld [vmem:[%s3 + $0x28] sm:$0xff]
    %v51 = vld [vmem:[%s3 + $0x30] sm:$0xff]
    %v52 = vld [vmem:[%s3 + $0x38] sm:$0xff]
    %v53 = vld [vmem:[%s5] sm:$0xff]
    %v54 = vld [vmem:[%s5 + $0x8] sm:$0xff]
    %v55 = vld [vmem:[%s5 + $0x10] sm:$0xff]
    %v56 = vld [vmem:[%s5 + $0x18] sm:$0xff]
    %v57 = vld [vmem:[%s2] sm:$0x1]
    %v59 = vlaneseq
    %v60 = vshrl.u32 %v59, 7
    %v61 = vsub.s32 0, %v60
    %v62 = vrot.slane %v57, %v61
    %v64 = vld [vmem:[%s4] sm:$0x1]
    %v66 = vlaneseq
    %v67 = vshrl.u32 %v66, 7
    %v68 = vsub.s32 0, %v67
    %v69 = vrot.slane %v64, %v68
    %v71 = vld [vmem:[%s6] sm:$0x1]
    %v73 = vlaneseq
    %v74 = vshrl.u32 %v73, 7
    %v75 = vsub.s32 0, %v74
    %v76 = vrot.slane %v71, %v75
    %v78 = vld [vmem:[%s0] sm:$0x3]
    %v79 = vxor.u32 %v78, 2147483648
    %v80 = vmul.f32 %v79, 1.442695
    %v81 = vpow.pop %v80
    %v82 = vadd.f32 %v81, 1.0
    %v83 = vrcp.pop %v82
    %v84 = vmul.f32 1.0, %v83
    %v85 = vtanh.pop %v78
    %v86 = vmul.f32 %v84, 0.0
    %88 = vrot.lane.b32.xlu0 %v85, 64
    %v89 = vpop.permute.xlu0 %88
    %v91 = vmul.f32 %v84, %v89
    %93 = vrot.lane.b32.xlu0 %v91, 32
    %v94 = vpop.permute.xlu0 %93
    %v96 = vadd.f32 %v86, %v94
    %v97 = vtanh.pop %v96
    %99 = vrot.lane.b32.xlu0 %v97, 64
    %v100 = vpop.permute.xlu0 %99
    %v102 = vmul.f32 %v84, %v100
    %104 = vrot.lane.b32.xlu0 %v102, 32
    %v105 = vpop.permute.xlu0 %104
    %vm107 = vcmask 261120
    %v108 = vsel %vm107, %v105, 0.0
    %vm109 = vcmask 523264
    %v111 = vsel %vm109, %v108, 0
    %113 = vmatprep.subr.mxu0 0.0
    %114 = vmatpush1.msra.mxu0 0.0
    %115 = vmatprep.subr.mxu0 0.0
    %116 = vmatpush1.msra.mxu0 0.0
    %117 = vmatprep.subr.mxu0 0.0
    %118 = vmatpush1.msra.mxu0 0.0
    %119 = vmatprep.subr.mxu0 0.0
    %120 = vmatpush1.msra.mxu0 0.0
    %121 = vmatprep.subr.mxu0 0.0
    %122 = vmatpush1.msra.mxu0 0.0
    %123 = vmatprep.subr.mxu0 0.0
    %124 = vmatpush1.msra.mxu0 0.0
    %125 = vmatprep.subr.mxu0 0.0
    %126 = vmatpush1.msra.mxu0 0.0
    %127 = vmatprep.subr.mxu0 0.0
    %128 = vmatpush1.msra.mxu0 0.0
    %129 = vmatprep.subr.mxu0 0.0
    %130 = vmatpush1.msra.mxu0 %v52
    %131 = vmatprep.subr.mxu0 0.0
    %132 = vmatpush1.msra.mxu0 %v51
    %133 = vmatprep.subr.mxu0 0.0
    %134 = vmatpush1.msra.mxu0 %v50
    %135 = vmatprep.subr.mxu0 0.0
    %136 = vmatpush1.msra.mxu0 %v49
    %137 = vmatprep.subr.mxu0 0.0
    %138 = vmatpush1.msra.mxu0 %v48
    %139 = vmatprep.subr.mxu0 0.0
    %140 = vmatpush1.msra.mxu0 %v47
    %141 = vmatprep.subr.mxu0 0.0
    %142 = vmatpush1.msra.mxu0 %v46
    %143 = vmatprep.subr.mxu0 0.0
    %144 = vmatpush1.msra.mxu0 %v45
    %145 = vmatprep.subr.mxu0 0.0
    %146 = vmatpush2.msra.mxu0 0.0
    %147 = vmatprep.subr.mxu0 0.0
    %148 = vmatpush2.msra.mxu0 0.0
    %149 = vmatprep.subr.mxu0 0.0
    %150 = vmatpush2.msra.mxu0 0.0
    %151 = vmatprep.subr.mxu0 0.0
    %152 = vmatpush2.msra.mxu0 0.0
    %153 = vmatprep.subr.mxu0 0.0
    %154 = vmatpush2.msra.mxu0 0.0
    %155 = vmatprep.subr.mxu0 0.0
    %156 = vmatpush2.msra.mxu0 0.0
    %157 = vmatprep.subr.mxu0 0.0
    %158 = vmatpush2.msra.mxu0 0.0
    %159 = vmatprep.subr.mxu0 0.0
    %160 = vmatpush2.msra.mxu0 0.0
    %161 = vmatprep.subr.mxu0 0.0
    %162 = vmatpush2.msra.mxu0 0.0
    %163 = vmatprep.subr.mxu0 0.0
    %164 = vmatpush2.msra.mxu0 0.0
    %165 = vmatprep.subr.mxu0 0.0
    %166 = vmatpush2.msra.mxu0 0.0
    %167 = vmatprep.subr.mxu0 0.0
    %168 = vmatpush2.msra.mxu0 0.0
    %169 = vmatprep.subr.mxu0 0.0
    %170 = vmatpush2.msra.mxu0 0.0
    %171 = vmatprep.subr.mxu0 0.0
    %172 = vmatpush2.msra.mxu0 0.0
    %173 = vmatprep.subr.mxu0 0.0
    %174 = vmatpush2.msra.mxu0 0.0
    %175 = vmatprep.subr.mxu0 0.0
    %176 = vmatpush2.msra.mxu0 0.0
    %177 = vmatprep.mubr.f32.mxu0 0.0
    %178 = vmatmul.mubr.f32.gmra.mxu0 %v111
    %v179 = vpop.f32.mrf.mxu0
    %v180 = vadd.f32 %v69, %v179
    %v181 = vpop.f32.mrf.mxu0
    %182 = vdwg.mxu0
    %v183 = vxor.u32 %v180, 2147483648
    %v184 = vmul.f32 %v183, 1.442695
    %v185 = vpow.pop %v184
    %v186 = vadd.f32 %v185, 1.0
    %v187 = vrcp.pop %v186
    %v188 = vmul.f32 1.0, %v187
    %v189 = vtanh.pop %v180
    %v190 = vmul.f32 %v188, 0.0
    %192 = vrot.lane.b32.xlu0 %v189, 64
    %v193 = vpop.permute.xlu0 %192
    %v195 = vmul.f32 %v188, %v193
    %197 = vrot.lane.b32.xlu0 %v195, 32
    %v198 = vpop.permute.xlu0 %197
    %v200 = vadd.f32 %v190, %v198
    %v201 = vtanh.pop %v200
    %203 = vrot.lane.b32.xlu0 %v201, 64
    %v204 = vpop.permute.xlu0 %203
    %v206 = vmul.f32 %v188, %v204
    %208 = vrot.lane.b32.xlu0 %v206, 32
    %v209 = vpop.permute.xlu0 %208
    %v210 = vsel %vm107, %v209, 0
    %212 = vmatprep.subr.mxu0 0.0
    %213 = vmatpush1.msra.mxu0 0.0
    %214 = vmatprep.subr.mxu0 0.0
    %215 = vmatpush1.msra.mxu0 0.0
    %216 = vmatprep.subr.mxu0 0.0
    %217 = vmatpush1.msra.mxu0 0.0
    %218 = vmatprep.subr.mxu0 0.0
    %219 = vmatpush1.msra.mxu0 0.0
    %220 = vmatprep.subr.mxu0 0.0
    %221 = vmatpush1.msra.mxu0 0.0
    %222 = vmatprep.subr.mxu0 0.0
    %223 = vmatpush1.msra.mxu0 0.0
    %224 = vmatprep.subr.mxu0 0.0
    %225 = vmatpush1.msra.mxu0 0.0
    %226 = vmatprep.subr.mxu0 0.0
    %227 = vmatpush1.msra.mxu0 0.0
    %228 = vmatprep.subr.mxu0 0.0
    %229 = vmatpush1.msra.mxu0 0.0
    %230 = vmatprep.subr.mxu0 0.0
    %231 = vmatpush1.msra.mxu0 0.0
    %232 = vmatprep.subr.mxu0 0.0
    %233 = vmatpush1.msra.mxu0 0.0
    %234 = vmatprep.subr.mxu0 0.0
    %235 = vmatpush1.msra.mxu0 0.0
    %236 = vmatprep.subr.mxu0 0.0
    %237 = vmatpush1.msra.mxu0 %v56
    %238 = vmatprep.subr.mxu0 0.0
    %239 = vmatpush1.msra.mxu0 %v55
    %240 = vmatprep.subr.mxu0 0.0
    %241 = vmatpush1.msra.mxu0 %v54
    %242 = vmatprep.subr.mxu0 0.0
    %243 = vmatpush1.msra.mxu0 %v53
    %244 = vmatprep.subr.mxu0 0.0
    %245 = vmatpush2.msra.mxu0 0.0
    %246 = vmatprep.subr.mxu0 0.0
    %247 = vmatpush2.msra.mxu0 0.0
    %248 = vmatprep.subr.mxu0 0.0
    %249 = vmatpush2.msra.mxu0 0.0
    %250 = vmatprep.subr.mxu0 0.0
    %251 = vmatpush2.msra.mxu0 0.0
    %252 = vmatprep.subr.mxu0 0.0
    %253 = vmatpush2.msra.mxu0 0.0
    %254 = vmatprep.subr.mxu0 0.0
    %255 = vmatpush2.msra.mxu0 0.0
    %256 = vmatprep.subr.mxu0 0.0
    %257 = vmatpush2.msra.mxu0 0.0
    %258 = vmatprep.subr.mxu0 0.0
    %259 = vmatpush2.msra.mxu0 0.0
    %260 = vmatprep.subr.mxu0 0.0
    %261 = vmatpush2.msra.mxu0 0.0
    %262 = vmatprep.subr.mxu0 0.0
    %263 = vmatpush2.msra.mxu0 0.0
    %264 = vmatprep.subr.mxu0 0.0
    %265 = vmatpush2.msra.mxu0 0.0
    %266 = vmatprep.subr.mxu0 0.0
    %267 = vmatpush2.msra.mxu0 0.0
    %268 = vmatprep.subr.mxu0 0.0
    %269 = vmatpush2.msra.mxu0 0.0
    %270 = vmatprep.subr.mxu0 0.0
    %271 = vmatpush2.msra.mxu0 0.0
    %272 = vmatprep.subr.mxu0 0.0
    %273 = vmatpush2.msra.mxu0 0.0
    %274 = vmatprep.subr.mxu0 0.0
    %275 = vmatpush2.msra.mxu0 0.0
    %276 = vmatprep.mubr.f32.mxu0 0.0
    %277 = vmatmul.mubr.f32.gmra.mxu0 %v210
    %v278 = vpop.f32.mrf.mxu0
    %v279 = vadd.f32 %v76, %v278
    %v280 = vpop.f32.mrf.mxu0
    %281 = vdwg.mxu0
    %vm282 = vcmask 975872
    %283 = vst.msk [vmem:[#allocation3] sm:$0x3] %vm282, %v279
    loop: start=1, step=1, limit=47
    $region38: #{autoencoder_lstm_forward.1} parent=1 // loop_pre_header
      _
    $region39: #{autoencoder_lstm_forward.1} parent=1 // loop_header
      %s285 = sphi 1, %s289
      %p286 = scmp.ge.s32.totalorder %s285, 47
      %v290 = vphi %v102, %v399
      %v291 = vphi %v96, %v393
      %v292 = vphi %v206, %v504
      %v293 = vphi %v200, %v498
    $region40: #{autoencoder_lstm_forward.1} parent=1 // loop_header_branch
      %288 = sbr.rel (%p286) target = $region44
    $region41: #{autoencoder_lstm_forward.1} parent=1 // loop_body
      %295 = vrot.lane.b32.xlu0 %v292, 32
      %v296 = vpop.permute.xlu0 %295
      %299 = vrot.lane.b32.xlu0 %v290, 64
      %v300 = vpop.permute.xlu0 %299
      %v302 = vsel %vm107, %v296, %v300
      %v304 = vsel %vm109, %v302, 0
      %306 = vmatprep.subr.mxu0 0.0
      %307 = vmatpush1.msra.mxu0 0.0
      %308 = vmatprep.subr.mxu0 0.0
      %309 = vmatpush1.msra.mxu0 0.0
      %310 = vmatprep.subr.mxu0 0.0
      %311 = vmatpush1.msra.mxu0 0.0
      %312 = vmatprep.subr.mxu0 0.0
      %313 = vmatpush1.msra.mxu0 0.0
      %314 = vmatprep.subr.mxu0 0.0
      %315 = vmatpush1.msra.mxu0 0.0
      %316 = vmatprep.subr.mxu0 0.0
      %317 = vmatpush1.msra.mxu0 0.0
      %318 = vmatprep.subr.mxu0 0.0
      %319 = vmatpush1.msra.mxu0 0.0
      %320 = vmatprep.subr.mxu0 0.0
      %321 = vmatpush1.msra.mxu0 0.0
      %322 = vmatprep.subr.mxu0 0.0
      %323 = vmatpush1.msra.mxu0 %v44
      %324 = vmatprep.subr.mxu0 0.0
      %325 = vmatpush1.msra.mxu0 %v43
      %326 = vmatprep.subr.mxu0 0.0
      %327 = vmatpush1.msra.mxu0 %v42
      %328 = vmatprep.subr.mxu0 0.0
      %329 = vmatpush1.msra.mxu0 %v41
      %330 = vmatprep.subr.mxu0 0.0
      %331 = vmatpush1.msra.mxu0 %v40
      %332 = vmatprep.subr.mxu0 0.0
      %333 = vmatpush1.msra.mxu0 %v39
      %334 = vmatprep.subr.mxu0 0.0
      %335 = vmatpush1.msra.mxu0 %v38
      %336 = vmatprep.subr.mxu0 0.0
      %337 = vmatpush1.msra.mxu0 %v37
      %338 = vmatprep.subr.mxu0 0.0
      %339 = vmatpush2.msra.mxu0 0.0
      %340 = vmatprep.subr.mxu0 0.0
      %341 = vmatpush2.msra.mxu0 0.0
      %342 = vmatprep.subr.mxu0 0.0
      %343 = vmatpush2.msra.mxu0 0.0
      %344 = vmatprep.subr.mxu0 0.0
      %345 = vmatpush2.msra.mxu0 0.0
      %346 = vmatprep.subr.mxu0 0.0
      %347 = vmatpush2.msra.mxu0 0.0
      %348 = vmatprep.subr.mxu0 0.0
      %349 = vmatpush2.msra.mxu0 0.0
      %350 = vmatprep.subr.mxu0 0.0
      %351 = vmatpush2.msra.mxu0 0.0
      %352 = vmatprep.subr.mxu0 0.0
      %353 = vmatpush2.msra.mxu0 0.0
      %354 = vmatprep.subr.mxu0 0.0
      %355 = vmatpush2.msra.mxu0 0.0
      %356 = vmatprep.subr.mxu0 0.0
      %357 = vmatpush2.msra.mxu0 0.0
      %358 = vmatprep.subr.mxu0 0.0
      %359 = vmatpush2.msra.mxu0 0.0
      %360 = vmatprep.subr.mxu0 0.0
      %361 = vmatpush2.msra.mxu0 0.0
      %362 = vmatprep.subr.mxu0 0.0
      %363 = vmatpush2.msra.mxu0 0.0
      %364 = vmatprep.subr.mxu0 0.0
      %365 = vmatpush2.msra.mxu0 0.0
      %366 = vmatprep.subr.mxu0 0.0
      %367 = vmatpush2.msra.mxu0 0.0
      %368 = vmatprep.subr.mxu0 0.0
      %369 = vmatpush2.msra.mxu0 0.0
      %370 = vmatprep.mubr.f32.mxu0 0.0
      %371 = vmatmul.mubr.f32.gmra.mxu0 %v304
      %v372 = vpop.f32.mrf.mxu0
      %v373 = vadd.f32 %v62, %v372
      %v374 = vpop.f32.mrf.mxu0
      %375 = vdwg.mxu0
      %v376 = vxor.u32 %v373, 2147483648
      %v377 = vmul.f32 %v376, 1.442695
      %v378 = vpow.pop %v377
      %v379 = vadd.f32 %v378, 1.0
      %v380 = vrcp.pop %v379
      %v381 = vmul.f32 1.0, %v380
      %v382 = vtanh.pop %v373
      %v383 = vmul.f32 %v381, %v291
      %385 = vrot.lane.b32.xlu0 %v382, 64
      %v386 = vpop.permute.xlu0 %385
      %v388 = vmul.f32 %v381, %v386
      %390 = vrot.lane.b32.xlu0 %v388, 32
      %v391 = vpop.permute.xlu0 %390
      %v393 = vadd.f32 %v383, %v391
      %v394 = vtanh.pop %v393
      %396 = vrot.lane.b32.xlu0 %v394, 64
      %v397 = vpop.permute.xlu0 %396
      %v399 = vmul.f32 %v381, %v397
      %401 = vrot.lane.b32.xlu0 %v399, 32
      %v402 = vpop.permute.xlu0 %401
      %404 = vrot.lane.b32.xlu0 %v292, 64
      %v405 = vpop.permute.xlu0 %404
      %v407 = vsel %vm107, %v402, %v405
      %v409 = vsel %vm109, %v407, 0
      %411 = vmatprep.subr.mxu0 0.0
      %412 = vmatpush1.msra.mxu0 0.0
      %413 = vmatprep.subr.mxu0 0.0
      %414 = vmatpush1.msra.mxu0 0.0
      %415 = vmatprep.subr.mxu0 0.0
      %416 = vmatpush1.msra.mxu0 0.0
      %417 = vmatprep.subr.mxu0 0.0
      %418 = vmatpush1.msra.mxu0 0.0
      %419 = vmatprep.subr.mxu0 0.0
      %420 = vmatpush1.msra.mxu0 0.0
      %421 = vmatprep.subr.mxu0 0.0
      %422 = vmatpush1.msra.mxu0 0.0
      %423 = vmatprep.subr.mxu0 0.0
      %424 = vmatpush1.msra.mxu0 0.0
      %425 = vmatprep.subr.mxu0 0.0
      %426 = vmatpush1.msra.mxu0 0.0
      %427 = vmatprep.subr.mxu0 0.0
      %428 = vmatpush1.msra.mxu0 %v52
      %429 = vmatprep.subr.mxu0 0.0
      %430 = vmatpush1.msra.mxu0 %v51
      %431 = vmatprep.subr.mxu0 0.0
      %432 = vmatpush1.msra.mxu0 %v50
      %433 = vmatprep.subr.mxu0 0.0
      %434 = vmatpush1.msra.mxu0 %v49
      %435 = vmatprep.subr.mxu0 0.0
      %436 = vmatpush1.msra.mxu0 %v48
      %437 = vmatprep.subr.mxu0 0.0
      %438 = vmatpush1.msra.mxu0 %v47
      %439 = vmatprep.subr.mxu0 0.0
      %440 = vmatpush1.msra.mxu0 %v46
      %441 = vmatprep.subr.mxu0 0.0
      %442 = vmatpush1.msra.mxu0 %v45
      %443 = vmatprep.subr.mxu0 0.0
      %444 = vmatpush2.msra.mxu0 0.0
      %445 = vmatprep.subr.mxu0 0.0
      %446 = vmatpush2.msra.mxu0 0.0
      %447 = vmatprep.subr.mxu0 0.0
      %448 = vmatpush2.msra.mxu0 0.0
      %449 = vmatprep.subr.mxu0 0.0
      %450 = vmatpush2.msra.mxu0 0.0
      %451 = vmatprep.subr.mxu0 0.0
      %452 = vmatpush2.msra.mxu0 0.0
      %453 = vmatprep.subr.mxu0 0.0
      %454 = vmatpush2.msra.mxu0 0.0
      %455 = vmatprep.subr.mxu0 0.0
      %456 = vmatpush2.msra.mxu0 0.0
      %457 = vmatprep.subr.mxu0 0.0
      %458 = vmatpush2.msra.mxu0 0.0
      %459 = vmatprep.subr.mxu0 0.0
      %460 = vmatpush2.msra.mxu0 0.0
      %461 = vmatprep.subr.mxu0 0.0
      %462 = vmatpush2.msra.mxu0 0.0
      %463 = vmatprep.subr.mxu0 0.0
      %464 = vmatpush2.msra.mxu0 0.0
      %465 = vmatprep.subr.mxu0 0.0
      %466 = vmatpush2.msra.mxu0 0.0
      %467 = vmatprep.subr.mxu0 0.0
      %468 = vmatpush2.msra.mxu0 0.0
      %469 = vmatprep.subr.mxu0 0.0
      %470 = vmatpush2.msra.mxu0 0.0
      %471 = vmatprep.subr.mxu0 0.0
      %472 = vmatpush2.msra.mxu0 0.0
      %473 = vmatprep.subr.mxu0 0.0
      %474 = vmatpush2.msra.mxu0 0.0
      %475 = vmatprep.mubr.f32.mxu0 0.0
      %476 = vmatmul.mubr.f32.gmra.mxu0 %v409
      %v477 = vpop.f32.mrf.mxu0
      %v478 = vadd.f32 %v69, %v477
      %v479 = vpop.f32.mrf.mxu0
      %480 = vdwg.mxu0
      %v481 = vxor.u32 %v478, 2147483648
      %v482 = vmul.f32 %v481, 1.442695
      %v483 = vpow.pop %v482
      %v484 = vadd.f32 %v483, 1.0
      %v485 = vrcp.pop %v484
      %v486 = vmul.f32 1.0, %v485
      %v487 = vtanh.pop %v478
      %v488 = vmul.f32 %v486, %v293
      %490 = vrot.lane.b32.xlu0 %v487, 64
      %v491 = vpop.permute.xlu0 %490
      %v493 = vmul.f32 %v486, %v491
      %495 = vrot.lane.b32.xlu0 %v493, 32
      %v496 = vpop.permute.xlu0 %495
      %v498 = vadd.f32 %v488, %v496
      %v499 = vtanh.pop %v498
      %501 = vrot.lane.b32.xlu0 %v499, 64
      %v502 = vpop.permute.xlu0 %501
      %v504 = vmul.f32 %v486, %v502
      %506 = vrot.lane.b32.xlu0 %v504, 32
      %v507 = vpop.permute.xlu0 %506
      %v508 = vsel %vm107, %v507, 0
      %510 = vmatprep.subr.mxu0 0.0
      %511 = vmatpush1.msra.mxu0 0.0
      %512 = vmatprep.subr.mxu0 0.0
      %513 = vmatpush1.msra.mxu0 0.0
      %514 = vmatprep.subr.mxu0 0.0
      %515 = vmatpush1.msra.mxu0 0.0
      %516 = vmatprep.subr.mxu0 0.0
      %517 = vmatpush1.msra.mxu0 0.0
      %518 = vmatprep.subr.mxu0 0.0
      %519 = vmatpush1.msra.mxu0 0.0
      %520 = vmatprep.subr.mxu0 0.0
      %521 = vmatpush1.msra.mxu0 0.0
      %522 = vmatprep.subr.mxu0 0.0
      %523 = vmatpush1.msra.mxu0 0.0
      %524 = vmatprep.subr.mxu0 0.0
      %525 = vmatpush1.msra.mxu0 0.0
      %526 = vmatprep.subr.mxu0 0.0
      %527 = vmatpush1.msra.mxu0 0.0
      %528 = vmatprep.subr.mxu0 0.0
      %529 = vmatpush1.msra.mxu0 0.0
      %530 = vmatprep.subr.mxu0 0.0
      %531 = vmatpush1.msra.mxu0 0.0
      %532 = vmatprep.subr.mxu0 0.0
      %533 = vmatpush1.msra.mxu0 0.0
      %534 = vmatprep.subr.mxu0 0.0
      %535 = vmatpush1.msra.mxu0 %v56
      %536 = vmatprep.subr.mxu0 0.0
      %537 = vmatpush1.msra.mxu0 %v55
      %538 = vmatprep.subr.mxu0 0.0
      %539 = vmatpush1.msra.mxu0 %v54
      %540 = vmatprep.subr.mxu0 0.0
      %541 = vmatpush1.msra.mxu0 %v53
      %542 = vmatprep.subr.mxu0 0.0
      %543 = vmatpush2.msra.mxu0 0.0
      %544 = vmatprep.subr.mxu0 0.0
      %545 = vmatpush2.msra.mxu0 0.0
      %546 = vmatprep.subr.mxu0 0.0
      %547 = vmatpush2.msra.mxu0 0.0
      %548 = vmatprep.subr.mxu0 0.0
      %549 = vmatpush2.msra.mxu0 0.0
      %550 = vmatprep.subr.mxu0 0.0
      %551 = vmatpush2.msra.mxu0 0.0
      %552 = vmatprep.subr.mxu0 0.0
      %553 = vmatpush2.msra.mxu0 0.0
      %554 = vmatprep.subr.mxu0 0.0
      %555 = vmatpush2.msra.mxu0 0.0
      %556 = vmatprep.subr.mxu0 0.0
      %557 = vmatpush2.msra.mxu0 0.0
      %558 = vmatprep.subr.mxu0 0.0
      %559 = vmatpush2.msra.mxu0 0.0
      %560 = vmatprep.subr.mxu0 0.0
      %561 = vmatpush2.msra.mxu0 0.0
      %562 = vmatprep.subr.mxu0 0.0
      %563 = vmatpush2.msra.mxu0 0.0
      %564 = vmatprep.subr.mxu0 0.0
      %565 = vmatpush2.msra.mxu0 0.0
      %566 = vmatprep.subr.mxu0 0.0
      %567 = vmatpush2.msra.mxu0 0.0
      %568 = vmatprep.subr.mxu0 0.0
      %569 = vmatpush2.msra.mxu0 0.0
      %570 = vmatprep.subr.mxu0 0.0
      %571 = vmatpush2.msra.mxu0 0.0
      %572 = vmatprep.subr.mxu0 0.0
      %573 = vmatpush2.msra.mxu0 0.0
      %574 = vmatprep.mubr.f32.mxu0 0.0
      %575 = vmatmul.mubr.f32.gmra.mxu0 %v508
      %v576 = vpop.f32.mrf.mxu0
      %v577 = vadd.f32 %v76, %v576
      %v578 = vpop.f32.mrf.mxu0
      %579 = vdwg.mxu0
      %s580 = smul.u32 %s285, 2
      %s581 = scalar_lea.vmem [#allocation3], %s580
      %582 = vst.msk [vmem:[%s581] sm:$0x3] %vm282, %v577
    $region42: #{autoencoder_lstm_forward.1} parent=1 // loop_footer
      %s289 = sadd.s32 1, %s285
    $region43: #{autoencoder_lstm_forward.1} parent=1 // loop_footer_branch
      %284 = sbr.rel target = $region39
    $region44: #{autoencoder_lstm_forward.1} parent=1 // loop_exit
      _
    %v583 = vld [vmem:[%s7] sm:$0xff]
    %v584 = vld [vmem:[%s7 + $0x8] sm:$0xff]
    %v585 = vld [vmem:[%s7 + $0x10] sm:$0xff]
    %v586 = vld [vmem:[%s7 + $0x18] sm:$0xff]
    %v587 = vld [vmem:[#allocation2] sm:$0x1]
    %v589 = vlaneseq
    %v590 = vshrl.u32 %v589, 7
    %v591 = vsub.s32 0, %v590
    %v592 = vrot.slane %v587, %v591
    %595 = vrot.lane.b32.xlu0 %v292, 32
    %v596 = vpop.permute.xlu0 %595
    %v597 = vsel %vm107, %v596, 0
    %599 = vmatprep.subr.mxu0 0.0
    %600 = vmatpush1.msra.mxu0 0.0
    %601 = vmatprep.subr.mxu0 0.0
    %602 = vmatpush1.msra.mxu0 0.0
    %603 = vmatprep.subr.mxu0 0.0
    %604 = vmatpush1.msra.mxu0 0.0
    %605 = vmatprep.subr.mxu0 0.0
    %606 = vmatpush1.msra.mxu0 0.0
    %607 = vmatprep.subr.mxu0 0.0
    %608 = vmatpush1.msra.mxu0 0.0
    %609 = vmatprep.subr.mxu0 0.0
    %610 = vmatpush1.msra.mxu0 0.0
    %611 = vmatprep.subr.mxu0 0.0
    %612 = vmatpush1.msra.mxu0 0.0
    %613 = vmatprep.subr.mxu0 0.0
    %614 = vmatpush1.msra.mxu0 0.0
    %615 = vmatprep.subr.mxu0 0.0
    %616 = vmatpush1.msra.mxu0 0.0
    %617 = vmatprep.subr.mxu0 0.0
    %618 = vmatpush1.msra.mxu0 0.0
    %619 = vmatprep.subr.mxu0 0.0
    %620 = vmatpush1.msra.mxu0 0.0
    %621 = vmatprep.subr.mxu0 0.0
    %622 = vmatpush1.msra.mxu0 0.0
    %623 = vmatprep.subr.mxu0 0.0
    %624 = vmatpush1.msra.mxu0 %v586
    %625 = vmatprep.subr.mxu0 0.0
    %626 = vmatpush1.msra.mxu0 %v585
    %627 = vmatprep.subr.mxu0 0.0
    %628 = vmatpush1.msra.mxu0 %v584
    %629 = vmatprep.subr.mxu0 0.0
    %630 = vmatpush1.msra.mxu0 %v583
    %631 = vmatprep.subr.mxu0 0.0
    %632 = vmatpush2.msra.mxu0 0.0
    %633 = vmatprep.subr.mxu0 0.0
    %634 = vmatpush2.msra.mxu0 0.0
    %635 = vmatprep.subr.mxu0 0.0
    %636 = vmatpush2.msra.mxu0 0.0
    %637 = vmatprep.subr.mxu0 0.0
    %638 = vmatpush2.msra.mxu0 0.0
    %639 = vmatprep.subr.mxu0 0.0
    %640 = vmatpush2.msra.mxu0 0.0
    %641 = vmatprep.subr.mxu0 0.0
    %642 = vmatpush2.msra.mxu0 0.0
    %643 = vmatprep.subr.mxu0 0.0
    %644 = vmatpush2.msra.mxu0 0.0
    %645 = vmatprep.subr.mxu0 0.0
    %646 = vmatpush2.msra.mxu0 0.0
    %647 = vmatprep.subr.mxu0 0.0
    %648 = vmatpush2.msra.mxu0 0.0
    %649 = vmatprep.subr.mxu0 0.0
    %650 = vmatpush2.msra.mxu0 0.0
    %651 = vmatprep.subr.mxu0 0.0
    %652 = vmatpush2.msra.mxu0 0.0
    %653 = vmatprep.subr.mxu0 0.0
    %654 = vmatpush2.msra.mxu0 0.0
    %655 = vmatprep.subr.mxu0 0.0
    %656 = vmatpush2.msra.mxu0 0.0
    %657 = vmatprep.subr.mxu0 0.0
    %658 = vmatpush2.msra.mxu0 0.0
    %659 = vmatprep.subr.mxu0 0.0
    %660 = vmatpush2.msra.mxu0 0.0
    %661 = vmatprep.subr.mxu0 0.0
    %662 = vmatpush2.msra.mxu0 0.0
    %663 = vmatprep.mubr.f32.mxu0 0.0
    %664 = vmatmul.mubr.f32.gmra.mxu0 %v597
    %v665 = vpop.f32.mrf.mxu0
    %v666 = vadd.f32 %v592, %v665
    %v667 = vpop.f32.mrf.mxu0
    %668 = vdwg.mxu0
    %vm669 = vcmask 1024
    %670 = vst.msk [vmem:[%s10] sm:$0x3] %vm669, %v666
    // Predicated region
    $region45: #{autoencoder_lstm_forward.1} parent=1 // pred_check
      _
    $region46: #{autoencoder_lstm_forward.1} parent=1 // pred_check_branch
      %672 = sbr.rel (0) target = $region48
    $region47: #{autoencoder_lstm_forward.1} parent=1 // pred_region
      %s674 = ssub.s32 1504, 1504
      %675 = vsyncadd [#allocation4], %s674
      %s676 = sshll.u32 [#allocation3], 4
      %s677 = int_to_ptr.vmem [resolvable:$true] %s676
      %682 = dma.vmem_to_hbm [thread:$0]  %s677, 1504, %s9, [#allocation4], 32, 32, 2
    $region48: #{autoencoder_lstm_forward.1} parent=1 // pred_fallthru
      _
    // Predicated region
    $region49: #{autoencoder_lstm_forward.1} parent=1 // pred_check
      _
    $region50: #{autoencoder_lstm_forward.1} parent=1 // pred_check_branch
      %684 = sbr.rel (0) target = $region52
    $region51: #{autoencoder_lstm_forward.1} parent=1 // pred_region
      _
    $region52: #{autoencoder_lstm_forward.1} parent=1 // pred_fallthru
      _
    // Predicated region
    $region53: #{autoencoder_lstm_forward.1} parent=1 // pred_check
      _
    $region54: #{autoencoder_lstm_forward.1} parent=1 // pred_check_branch
      %686 = sbr.rel (0) target = $region56
    $region55: #{autoencoder_lstm_forward.1} parent=1 // pred_region
      %687 = dma.done [#allocation4], 1504
    $region56: #{autoencoder_lstm_forward.1} parent=1 // pred_fallthru
      _
    // Predicated region
    $region57: #{autoencoder_lstm_forward.1} parent=1 // pred_check
      _
    $region58: #{autoencoder_lstm_forward.1} parent=1 // pred_check_branch
      %689 = sbr.rel (0) target = $region60
    $region59: #{autoencoder_lstm_forward.1} parent=1 // pred_region
      _
    $region60: #{autoencoder_lstm_forward.1} parent=1 // pred_fallthru
      _
    %690 = vsyncpa [#allocation4], 1

</llo_original>
